<compile_context>
chip_gen: v7x
topology: tpu7x:2x2x1
jax: 0.10.0
libtpu: 0.0.40
codegen_flags: <defaults>
</compile_context>

<pallas_src>
import functools
import math

import jax
import jax.numpy as jnp
from jax.experimental import pallas as pl
from jax.experimental.pallas import tpu as pltpu


# ----------------------------------------------------------------------------
# Pallas kernel:  out = x @ w + b   (single dot, full-extent K and N blocks)
# ----------------------------------------------------------------------------

def _round_up(x, m):
    return (x + m - 1) // m * m


def _linear_bias_kernel(x_ref, w_ref, b_ref, o_ref):
    """One MXU pass per M-tile: o = x @ w + b, f32 accumulation."""
    o_ref[...] = (
        jnp.dot(x_ref[...], w_ref[...], preferred_element_type=jnp.float32)
        + b_ref[...]                      # (1, N) broadcasts over the tm rows
    ).astype(o_ref.dtype)


@functools.lru_cache(maxsize=None)
def _build_linear(Mp, K, N, tm, x_dtype, w_dtype):
    return pl.pallas_call(
        _linear_bias_kernel,
        out_shape=jax.ShapeDtypeStruct((Mp, N), jnp.float32),
        grid=(Mp // tm,),
        in_specs=[
            pl.BlockSpec((tm, K), lambda i: (i, 0)),    # x tile   (full K extent)
            pl.BlockSpec((K, N), lambda i: (0, 0)),     # weight   (full K, full N)
            pl.BlockSpec((1, N), lambda i: (0, 0)),     # bias     (full N)
        ],
        out_specs=pl.BlockSpec((tm, N), lambda i: (i, 0)),
        compiler_params=pltpu.CompilerParams(
            dimension_semantics=("parallel",),          # M blocks shard across cores
        ),
    )


def pallas_linear(x, w_t, b2d):
    """x: [M, K], w_t: [K, N] (pre-transposed), b2d: [1, N] -> [M, N] f32."""
    M, K = x.shape
    N = w_t.shape[1]

    if M <= 256:
        # Whole batch in one block: block dim == array dim is always legal, no padding.
        tm, Mp, xp = M, M, x
    else:
        # Large-batch fallback: tile M (multiple M blocks -> megacore-parallel on v7x).
        tm = 256
        Mp = _round_up(M, tm)
        xp = jnp.pad(x, ((0, Mp - M), (0, 0)))

    out = _build_linear(Mp, K, N, tm, x.dtype.name, w_t.dtype.name)(xp, w_t, b2d)
    return out[:M]


# ----------------------------------------------------------------------------
# ClassificationHead parameters + forward
# ----------------------------------------------------------------------------

def init_classification_head(key, in_ch, out_dim):
    """Matches torch.nn.Linear default init: U(-1/sqrt(fan_in), 1/sqrt(fan_in)).

    Weights are stored already transposed as [in_ch, out_dim] and the bias as
    [1, out_dim] so the jitted forward does zero per-call layout work.
    """
    kw, kb = jax.random.split(key)
    bound = 1.0 / math.sqrt(in_ch)
    w_t = jax.random.uniform(kw, (in_ch, out_dim), jnp.float32, -bound, bound)
    b = jax.random.uniform(kb, (1, out_dim), jnp.float32, -bound, bound)
    return {"w_t": w_t, "b": b}


def classification_head_forward(params, feat_out, meta_out=None):
    x = feat_out.astype(jnp.float32)
    if meta_out is not None:
        x = jnp.concatenate([x, meta_out.astype(jnp.float32)], axis=1)
    # nn.Dropout(0.5): identity in inference mode.
    # TODO(synk): train-mode dropout (random Bernoulli mask + 2x rescale) not implemented.
    return pallas_linear(x, params["w_t"], params["b"])
    # Note: self.activation = nn.Softmax(dim=1) is never used in forward(), so no softmax here.


# ----------------------------------------------------------------------------

if __name__ == "__main__":
    key = jax.random.PRNGKey(0)
    N, in_ch, meta_dim, out_dim = 4, 2048, 32, 16

    feat = jax.random.normal(jax.random.fold_in(key, 1), (N, in_ch), jnp.float32)
    meta = jax.random.normal(jax.random.fold_in(key, 2), (N, meta_dim), jnp.float32)

    head = init_classification_head(jax.random.fold_in(key, 3), in_ch, out_dim)
    head_meta = init_classification_head(jax.random.fold_in(key, 4),
                                         in_ch + meta_dim, out_dim)

    fwd = jax.jit(classification_head_forward)

    # Path 1: meta_out is None.
    y = jax.block_until_ready(fwd(head, feat))
    # Path 2: meta_out provided (concatenated before the linear layer).
    y_m = jax.block_until_ready(fwd(head_meta, feat, meta))

    assert y.shape == (N, out_dim), y.shape
    assert y_m.shape == (N, out_dim), y_m.shape

    # Reference check against plain jnp.
    ref = feat @ head["w_t"] + head["b"]
    ref_m = jnp.concatenate([feat, meta], axis=1) @ head_meta["w_t"] + head_meta["b"]
    assert jnp.allclose(y, ref, atol=1e-4, rtol=1e-4)
    assert jnp.allclose(y_m, ref_m, atol=1e-4, rtol=1e-4)
    assert bool(jnp.all(jnp.isfinite(y))) and bool(jnp.all(jnp.isfinite(y_m)))

    print("KERNEL_OK")
</pallas_src>

<mosaic_0001>
module attributes {stable_mosaic.version = 11 : i64} {
  func.func @_linear_bias_kernel(%arg0: i32, %arg1: memref<4x2048xf32, #tpu.memory_space<vmem>>, %arg2: memref<2048x16xf32, #tpu.memory_space<vmem>>, %arg3: memref<1x16xf32, #tpu.memory_space<vmem>>, %arg4: memref<4x16xf32, #tpu.memory_space<vmem>>) attributes {dimension_semantics = [#tpu.dimension_semantics<parallel>], iteration_bounds = array<i64: 1>, scalar_prefetch = 0 : i64, scratch_operands = 0 : i64, tpu.core_type = #tpu.core_type<tc>, window_params = [{transform_indices = @transform_0, window_bounds = array<i64: 4, 2048>}, {pipeline_mode = #tpu.pipeline_mode<synchronous>, transform_indices = @transform_1, window_bounds = array<i64: 2048, 16>}, {pipeline_mode = #tpu.pipeline_mode<synchronous>, transform_indices = @transform_2, window_bounds = array<i64: 1, 16>}, {transform_indices = @transform_3, window_bounds = array<i64: 4, 16>}]} {
    %c0 = arith.constant 0 : index
    %c0_0 = arith.constant 0 : index
    %0 = vector.load %arg1[%c0, %c0_0] : memref<4x2048xf32, #tpu.memory_space<vmem>>, vector<4x2048xf32>
    %c0_1 = arith.constant 0 : index
    %c0_2 = arith.constant 0 : index
    %1 = vector.load %arg2[%c0_1, %c0_2] : memref<2048x16xf32, #tpu.memory_space<vmem>>, vector<2048x16xf32>
    %cst = arith.constant dense<0.000000e+00> : vector<4x16xf32>
    %2 = tpu.matmul %0, %1, %cst {dimension_numbers = #tpu.dot_dimension_numbers<[1], [0], [0], [1], [0, 0, 1, 1], [], []>} : vector<4x2048xf32>, vector<2048x16xf32>, vector<4x16xf32> -> vector<4x16xf32>
    %c0_3 = arith.constant 0 : index
    %c0_4 = arith.constant 0 : index
    %3 = vector.load %arg3[%c0_3, %c0_4] : memref<1x16xf32, #tpu.memory_space<vmem>>, vector<1x16xf32>
    %4 = vector.broadcast %3 : vector<1x16xf32> to vector<4x16xf32>
    %5 = arith.addf %2, %4 : vector<4x16xf32>
    %c0_5 = arith.constant 0 : index
    %c0_6 = arith.constant 0 : index
    %6 = vector.load %arg4[%c0_5, %c0_6] : memref<4x16xf32, #tpu.memory_space<vmem>>, vector<4x16xf32>
    tpu.vector_store %arg4[%c0_5, %c0_6], %5 {strides = array<i32>} : memref<4x16xf32, #tpu.memory_space<vmem>>, vector<4x16xf32>,
    return
  }
  func.func @transform_0(%arg0: i32) -> (i32, i32) {
    %c0_i32 = arith.constant 0 : i32
    %c0_i32_0 = arith.constant 0 : i32
    return %arg0, %c0_i32 : i32, i32
  }
  func.func @transform_1(%arg0: i32) -> (i32, i32) {
    %c0_i32 = arith.constant 0 : i32
    %c0_i32_0 = arith.constant 0 : i32
    %c0_i32_1 = arith.constant 0 : i32
    return %c0_i32, %c0_i32_0 : i32, i32
  }
  func.func @transform_2(%arg0: i32) -> (i32, i32) {
    %c0_i32 = arith.constant 0 : i32
    %c0_i32_0 = arith.constant 0 : i32
    %c0_i32_1 = arith.constant 0 : i32
    return %c0_i32, %c0_i32_0 : i32, i32
  }
  func.func @transform_3(%arg0: i32) -> (i32, i32) {
    %c0_i32 = arith.constant 0 : i32
    %c0_i32_0 = arith.constant 0 : i32
    return %arg0, %c0_i32 : i32, i32
  }
}

</mosaic_0001>

<llo_original>
// kernel: classification_head_forward.1
$region0: #{classification_head_forward.1}
  #allocation0 [shape = 'u32[]', space=smem, size = 0x4, offset = 0x4, fixed_abs, tag = 'smem constant byte address 0x4 - core index']
  #allocation1 [shape = 'u32[144,128]{1,0:T(1,128)}', space=vmem, size = 0x12000, scoped, tag = 'internal scratch']
  %s0 = inlined_call_operand.vmem [shape: f32[4,2048], index: 0, kind: input, shape index: {}]
  %s1 = inlined_call_operand.vmem [shape: f32[2048,16], index: 1, kind: input, shape index: {}]
  %s2 = inlined_call_operand.vmem [shape: f32[1,16], index: 2, kind: input, shape index: {}]
  %s3 = inlined_call_operand.hbm [shape: f32[4,16], index: 3, kind: output, shape index: {}]
  %s4 = sld [smem:[#allocation0]]
  $region22: #{classification_head_forward.1} parent=0
    _
  %s6 = ssub.s32 1, %s4
  %s7 = scalar_select 0, %s6, %s4
  $region1: #{classification_head_forward.1} parent=0
    #allocation2 [shape = 'u8[2048]{0}', space=vmem, size = 0x800, scoped, tag = 'output window, operand 0, single buffered']
    #allocation3 [shape = 's32[1]{0}', space=sflag, size = 0x4, scoped, tag = 'scoped memory for classification_head_forward.1']
    %8 = vsyncpa [#allocation3], 0
    // Predicated region
    $region2: #{classification_head_forward.1} parent=1 // pred_check
      _
    $region3: #{classification_head_forward.1} parent=1 // pred_check_branch
      %10 = sbr.rel (0) target = $region5
    $region4: #{classification_head_forward.1} parent=1 // pred_region
      _
    $region5: #{classification_head_forward.1} parent=1 // pred_fallthru
      _
    // Predicated region
    $region6: #{classification_head_forward.1} parent=1 // pred_check
      _
    $region7: #{classification_head_forward.1} parent=1 // pred_check_branch
      %12 = sbr.rel (0) target = $region9
    $region8: #{classification_head_forward.1} parent=1 // pred_region
      _
    $region9: #{classification_head_forward.1} parent=1 // pred_fallthru
      _
    // Predicated region
    $region10: #{classification_head_forward.1} parent=1 // pred_check
      _
    $region11: #{classification_head_forward.1} parent=1 // pred_check_branch
      %14 = sbr.rel (0) target = $region13
    $region12: #{classification_head_forward.1} parent=1 // pred_region
      _
    $region13: #{classification_head_forward.1} parent=1 // pred_fallthru
      _
    %v15 = vld [vmem:[%s0] sm:$0xff]
    %v16 = vld [vmem:[%s0 + $0x8] sm:$0xff]
    %v17 = vld [vmem:[%s0 + $0x10] sm:$0xff]
    %v18 = vld [vmem:[%s0 + $0x18] sm:$0xff]
    %v19 = vld [vmem:[%s0 + $0x20] sm:$0xff]
    %v20 = vld [vmem:[%s0 + $0x28] sm:$0xff]
    %v21 = vld [vmem:[%s0 + $0x30] sm:$0xff]
    %v22 = vld [vmem:[%s0 + $0x38] sm:$0xff]
    %v23 = vld [vmem:[%s1] sm:$0xff]
    %v24 = vld [vmem:[%s1 + $0x8] sm:$0xff]
    %v25 = vld [vmem:[%s1 + $0x10] sm:$0xff]
    %v26 = vld [vmem:[%s1 + $0x18] sm:$0xff]
    %v27 = vld [vmem:[%s1 + $0x20] sm:$0xff]
    %v28 = vld [vmem:[%s1 + $0x28] sm:$0xff]
    %v29 = vld [vmem:[%s1 + $0x30] sm:$0xff]
    %v30 = vld [vmem:[%s1 + $0x38] sm:$0xff]
    %v31 = vld [vmem:[%s1 + $0x40] sm:$0xff]
    %v32 = vld [vmem:[%s1 + $0x48] sm:$0xff]
    %v33 = vld [vmem:[%s1 + $0x50] sm:$0xff]
    %v34 = vld [vmem:[%s1 + $0x58] sm:$0xff]
    %v35 = vld [vmem:[%s1 + $0x60] sm:$0xff]
    %v36 = vld [vmem:[%s1 + $0x68] sm:$0xff]
    %v37 = vld [vmem:[%s1 + $0x70] sm:$0xff]
    %v38 = vld [vmem:[%s1 + $0x78] sm:$0xff]
    %v39 = vld [vmem:[%s1 + $0x80] sm:$0xff]
    %v40 = vld [vmem:[%s1 + $0x88] sm:$0xff]
    %v41 = vld [vmem:[%s1 + $0x90] sm:$0xff]
    %v42 = vld [vmem:[%s1 + $0x98] sm:$0xff]
    %v43 = vld [vmem:[%s1 + $0xa0] sm:$0xff]
    %v44 = vld [vmem:[%s1 + $0xa8] sm:$0xff]
    %v45 = vld [vmem:[%s1 + $0xb0] sm:$0xff]
    %v46 = vld [vmem:[%s1 + $0xb8] sm:$0xff]
    %v47 = vld [vmem:[%s1 + $0xc0] sm:$0xff]
    %v48 = vld [vmem:[%s1 + $0xc8] sm:$0xff]
    %v49 = vld [vmem:[%s1 + $0xd0] sm:$0xff]
    %v50 = vld [vmem:[%s1 + $0xd8] sm:$0xff]
    %v51 = vld [vmem:[%s1 + $0xe0] sm:$0xff]
    %v52 = vld [vmem:[%s1 + $0xe8] sm:$0xff]
    %v53 = vld [vmem:[%s1 + $0xf0] sm:$0xff]
    %v54 = vld [vmem:[%s1 + $0xf8] sm:$0xff]
    %v55 = vld [vmem:[%s1 + $0x100] sm:$0xff]
    %v56 = vld [vmem:[%s1 + $0x108] sm:$0xff]
    %v57 = vld [vmem:[%s1 + $0x110] sm:$0xff]
    %v58 = vld [vmem:[%s1 + $0x118] sm:$0xff]
    %v59 = vld [vmem:[%s1 + $0x120] sm:$0xff]
    %v60 = vld [vmem:[%s1 + $0x128] sm:$0xff]
    %v61 = vld [vmem:[%s1 + $0x130] sm:$0xff]
    %v62 = vld [vmem:[%s1 + $0x138] sm:$0xff]
    %v63 = vld [vmem:[%s1 + $0x140] sm:$0xff]
    %v64 = vld [vmem:[%s1 + $0x148] sm:$0xff]
    %v65 = vld [vmem:[%s1 + $0x150] sm:$0xff]
    %v66 = vld [vmem:[%s1 + $0x158] sm:$0xff]
    %v67 = vld [vmem:[%s1 + $0x160] sm:$0xff]
    %v68 = vld [vmem:[%s1 + $0x168] sm:$0xff]
    %v69 = vld [vmem:[%s1 + $0x170] sm:$0xff]
    %v70 = vld [vmem:[%s1 + $0x178] sm:$0xff]
    %v71 = vld [vmem:[%s1 + $0x180] sm:$0xff]
    %v72 = vld [vmem:[%s1 + $0x188] sm:$0xff]
    %v73 = vld [vmem:[%s1 + $0x190] sm:$0xff]
    %v74 = vld [vmem:[%s1 + $0x198] sm:$0xff]
    %v75 = vld [vmem:[%s1 + $0x1a0] sm:$0xff]
    %v76 = vld [vmem:[%s1 + $0x1a8] sm:$0xff]
    %v77 = vld [vmem:[%s1 + $0x1b0] sm:$0xff]
    %v78 = vld [vmem:[%s1 + $0x1b8] sm:$0xff]
    %v79 = vld [vmem:[%s1 + $0x1c0] sm:$0xff]
    %v80 = vld [vmem:[%s1 + $0x1c8] sm:$0xff]
    %v81 = vld [vmem:[%s1 + $0x1d0] sm:$0xff]
    %v82 = vld [vmem:[%s1 + $0x1d8] sm:$0xff]
    %v83 = vld [vmem:[%s1 + $0x1e0] sm:$0xff]
    %v84 = vld [vmem:[%s1 + $0x1e8] sm:$0xff]
    %v85 = vld [vmem:[%s1 + $0x1f0] sm:$0xff]
    %v86 = vld [vmem:[%s1 + $0x1f8] sm:$0xff]
    %v87 = vld [vmem:[%s1 + $0x200] sm:$0xff]
    %v88 = vld [vmem:[%s1 + $0x208] sm:$0xff]
    %v89 = vld [vmem:[%s1 + $0x210] sm:$0xff]
    %v90 = vld [vmem:[%s1 + $0x218] sm:$0xff]
    %v91 = vld [vmem:[%s1 + $0x220] sm:$0xff]
    %v92 = vld [vmem:[%s1 + $0x228] sm:$0xff]
    %v93 = vld [vmem:[%s1 + $0x230] sm:$0xff]
    %v94 = vld [vmem:[%s1 + $0x238] sm:$0xff]
    %v95 = vld [vmem:[%s1 + $0x240] sm:$0xff]
    %v96 = vld [vmem:[%s1 + $0x248] sm:$0xff]
    %v97 = vld [vmem:[%s1 + $0x250] sm:$0xff]
    %v98 = vld [vmem:[%s1 + $0x258] sm:$0xff]
    %v99 = vld [vmem:[%s1 + $0x260] sm:$0xff]
    %v100 = vld [vmem:[%s1 + $0x268] sm:$0xff]
    %v101 = vld [vmem:[%s1 + $0x270] sm:$0xff]
    %v102 = vld [vmem:[%s1 + $0x278] sm:$0xff]
    %v103 = vld [vmem:[%s1 + $0x280] sm:$0xff]
    %v104 = vld [vmem:[%s1 + $0x288] sm:$0xff]
    %v105 = vld [vmem:[%s1 + $0x290] sm:$0xff]
    %v106 = vld [vmem:[%s1 + $0x298] sm:$0xff]
    %v107 = vld [vmem:[%s1 + $0x2a0] sm:$0xff]
    %v108 = vld [vmem:[%s1 + $0x2a8] sm:$0xff]
    %v109 = vld [vmem:[%s1 + $0x2b0] sm:$0xff]
    %v110 = vld [vmem:[%s1 + $0x2b8] sm:$0xff]
    %v111 = vld [vmem:[%s1 + $0x2c0] sm:$0xff]
    %v112 = vld [vmem:[%s1 + $0x2c8] sm:$0xff]
    %v113 = vld [vmem:[%s1 + $0x2d0] sm:$0xff]
    %v114 = vld [vmem:[%s1 + $0x2d8] sm:$0xff]
    %v115 = vld [vmem:[%s1 + $0x2e0] sm:$0xff]
    %v116 = vld [vmem:[%s1 + $0x2e8] sm:$0xff]
    %v117 = vld [vmem:[%s1 + $0x2f0] sm:$0xff]
    %v118 = vld [vmem:[%s1 + $0x2f8] sm:$0xff]
    %v119 = vld [vmem:[%s1 + $0x300] sm:$0xff]
    %v120 = vld [vmem:[%s1 + $0x308] sm:$0xff]
    %v121 = vld [vmem:[%s1 + $0x310] sm:$0xff]
    %v122 = vld [vmem:[%s1 + $0x318] sm:$0xff]
    %v123 = vld [vmem:[%s1 + $0x320] sm:$0xff]
    %v124 = vld [vmem:[%s1 + $0x328] sm:$0xff]
    %v125 = vld [vmem:[%s1 + $0x330] sm:$0xff]
    %v126 = vld [vmem:[%s1 + $0x338] sm:$0xff]
    %v127 = vld [vmem:[%s1 + $0x340] sm:$0xff]
    %v128 = vld [vmem:[%s1 + $0x348] sm:$0xff]
    %v129 = vld [vmem:[%s1 + $0x350] sm:$0xff]
    %v130 = vld [vmem:[%s1 + $0x358] sm:$0xff]
    %v131 = vld [vmem:[%s1 + $0x360] sm:$0xff]
    %v132 = vld [vmem:[%s1 + $0x368] sm:$0xff]
    %v133 = vld [vmem:[%s1 + $0x370] sm:$0xff]
    %v134 = vld [vmem:[%s1 + $0x378] sm:$0xff]
    %v135 = vld [vmem:[%s1 + $0x380] sm:$0xff]
    %v136 = vld [vmem:[%s1 + $0x388] sm:$0xff]
    %v137 = vld [vmem:[%s1 + $0x390] sm:$0xff]
    %v138 = vld [vmem:[%s1 + $0x398] sm:$0xff]
    %v139 = vld [vmem:[%s1 + $0x3a0] sm:$0xff]
    %v140 = vld [vmem:[%s1 + $0x3a8] sm:$0xff]
    %v141 = vld [vmem:[%s1 + $0x3b0] sm:$0xff]
    %v142 = vld [vmem:[%s1 + $0x3b8] sm:$0xff]
    %v143 = vld [vmem:[%s1 + $0x3c0] sm:$0xff]
    %v144 = vld [vmem:[%s1 + $0x3c8] sm:$0xff]
    %v145 = vld [vmem:[%s1 + $0x3d0] sm:$0xff]
    %v146 = vld [vmem:[%s1 + $0x3d8] sm:$0xff]
    %v147 = vld [vmem:[%s1 + $0x3e0] sm:$0xff]
    %v148 = vld [vmem:[%s1 + $0x3e8] sm:$0xff]
    %v149 = vld [vmem:[%s1 + $0x3f0] sm:$0xff]
    %v150 = vld [vmem:[%s1 + $0x3f8] sm:$0xff]
    %v151 = vld [vmem:[%s1 + $0x400] sm:$0xff]
    %v152 = vld [vmem:[%s1 + $0x408] sm:$0xff]
    %v153 = vld [vmem:[%s1 + $0x410] sm:$0xff]
    %v154 = vld [vmem:[%s1 + $0x418] sm:$0xff]
    %v155 = vld [vmem:[%s1 + $0x420] sm:$0xff]
    %v156 = vld [vmem:[%s1 + $0x428] sm:$0xff]
    %v157 = vld [vmem:[%s1 + $0x430] sm:$0xff]
    %v158 = vld [vmem:[%s1 + $0x438] sm:$0xff]
    %v159 = vld [vmem:[%s1 + $0x440] sm:$0xff]
    %v160 = vld [vmem:[%s1 + $0x448] sm:$0xff]
    %v161 = vld [vmem:[%s1 + $0x450] sm:$0xff]
    %v162 = vld [vmem:[%s1 + $0x458] sm:$0xff]
    %v163 = vld [vmem:[%s1 + $0x460] sm:$0xff]
    %v164 = vld [vmem:[%s1 + $0x468] sm:$0xff]
    %v165 = vld [vmem:[%s1 + $0x470] sm:$0xff]
    %v166 = vld [vmem:[%s1 + $0x478] sm:$0xff]
    %v167 = vld [vmem:[%s1 + $0x480] sm:$0xff]
    %v168 = vld [vmem:[%s1 + $0x488] sm:$0xff]
    %v169 = vld [vmem:[%s1 + $0x490] sm:$0xff]
    %v170 = vld [vmem:[%s1 + $0x498] sm:$0xff]
    %v171 = vld [vmem:[%s1 + $0x4a0] sm:$0xff]
    %v172 = vld [vmem:[%s1 + $0x4a8] sm:$0xff]
    %v173 = vld [vmem:[%s1 + $0x4b0] sm:$0xff]
    %v174 = vld [vmem:[%s1 + $0x4b8] sm:$0xff]
    %v175 = vld [vmem:[%s1 + $0x4c0] sm:$0xff]
    %v176 = vld [vmem:[%s1 + $0x4c8] sm:$0xff]
    %v177 = vld [vmem:[%s1 + $0x4d0] sm:$0xff]
    %v178 = vld [vmem:[%s1 + $0x4d8] sm:$0xff]
    %v179 = vld [vmem:[%s1 + $0x4e0] sm:$0xff]
    %v180 = vld [vmem:[%s1 + $0x4e8] sm:$0xff]
    %v181 = vld [vmem:[%s1 + $0x4f0] sm:$0xff]
    %v182 = vld [vmem:[%s1 + $0x4f8] sm:$0xff]
    %v183 = vld [vmem:[%s1 + $0x500] sm:$0xff]
    %v184 = vld [vmem:[%s1 + $0x508] sm:$0xff]
    %v185 = vld [vmem:[%s1 + $0x510] sm:$0xff]
    %v186 = vld [vmem:[%s1 + $0x518] sm:$0xff]
    %v187 = vld [vmem:[%s1 + $0x520] sm:$0xff]
    %v188 = vld [vmem:[%s1 + $0x528] sm:$0xff]
    %v189 = vld [vmem:[%s1 + $0x530] sm:$0xff]
    %v190 = vld [vmem:[%s1 + $0x538] sm:$0xff]
    %v191 = vld [vmem:[%s1 + $0x540] sm:$0xff]
    %v192 = vld [vmem:[%s1 + $0x548] sm:$0xff]
    %v193 = vld [vmem:[%s1 + $0x550] sm:$0xff]
    %v194 = vld [vmem:[%s1 + $0x558] sm:$0xff]
    %v195 = vld [vmem:[%s1 + $0x560] sm:$0xff]
    %v196 = vld [vmem:[%s1 + $0x568] sm:$0xff]
    %v197 = vld [vmem:[%s1 + $0x570] sm:$0xff]
    %v198 = vld [vmem:[%s1 + $0x578] sm:$0xff]
    %v199 = vld [vmem:[%s1 + $0x580] sm:$0xff]
    %v200 = vld [vmem:[%s1 + $0x588] sm:$0xff]
    %v201 = vld [vmem:[%s1 + $0x590] sm:$0xff]
    %v202 = vld [vmem:[%s1 + $0x598] sm:$0xff]
    %v203 = vld [vmem:[%s1 + $0x5a0] sm:$0xff]
    %v204 = vld [vmem:[%s1 + $0x5a8] sm:$0xff]
    %v205 = vld [vmem:[%s1 + $0x5b0] sm:$0xff]
    %v206 = vld [vmem:[%s1 + $0x5b8] sm:$0xff]
    %v207 = vld [vmem:[%s1 + $0x5c0] sm:$0xff]
    %v208 = vld [vmem:[%s1 + $0x5c8] sm:$0xff]
    %v209 = vld [vmem:[%s1 + $0x5d0] sm:$0xff]
    %v210 = vld [vmem:[%s1 + $0x5d8] sm:$0xff]
    %v211 = vld [vmem:[%s1 + $0x5e0] sm:$0xff]
    %v212 = vld [vmem:[%s1 + $0x5e8] sm:$0xff]
    %v213 = vld [vmem:[%s1 + $0x5f0] sm:$0xff]
    %v214 = vld [vmem:[%s1 + $0x5f8] sm:$0xff]
    %v215 = vld [vmem:[%s1 + $0x600] sm:$0xff]
    %v216 = vld [vmem:[%s1 + $0x608] sm:$0xff]
    %v217 = vld [vmem:[%s1 + $0x610] sm:$0xff]
    %v218 = vld [vmem:[%s1 + $0x618] sm:$0xff]
    %v219 = vld [vmem:[%s1 + $0x620] sm:$0xff]
    %v220 = vld [vmem:[%s1 + $0x628] sm:$0xff]
    %v221 = vld [vmem:[%s1 + $0x630] sm:$0xff]
    %v222 = vld [vmem:[%s1 + $0x638] sm:$0xff]
    %v223 = vld [vmem:[%s1 + $0x640] sm:$0xff]
    %v224 = vld [vmem:[%s1 + $0x648] sm:$0xff]
    %v225 = vld [vmem:[%s1 + $0x650] sm:$0xff]
    %v226 = vld [vmem:[%s1 + $0x658] sm:$0xff]
    %v227 = vld [vmem:[%s1 + $0x660] sm:$0xff]
    %v228 = vld [vmem:[%s1 + $0x668] sm:$0xff]
    %v229 = vld [vmem:[%s1 + $0x670] sm:$0xff]
    %v230 = vld [vmem:[%s1 + $0x678] sm:$0xff]
    %v231 = vld [vmem:[%s1 + $0x680] sm:$0xff]
    %v232 = vld [vmem:[%s1 + $0x688] sm:$0xff]
    %v233 = vld [vmem:[%s1 + $0x690] sm:$0xff]
    %v234 = vld [vmem:[%s1 + $0x698] sm:$0xff]
    %v235 = vld [vmem:[%s1 + $0x6a0] sm:$0xff]
    %v236 = vld [vmem:[%s1 + $0x6a8] sm:$0xff]
    %v237 = vld [vmem:[%s1 + $0x6b0] sm:$0xff]
    %v238 = vld [vmem:[%s1 + $0x6b8] sm:$0xff]
    %v239 = vld [vmem:[%s1 + $0x6c0] sm:$0xff]
    %v240 = vld [vmem:[%s1 + $0x6c8] sm:$0xff]
    %v241 = vld [vmem:[%s1 + $0x6d0] sm:$0xff]
    %v242 = vld [vmem:[%s1 + $0x6d8] sm:$0xff]
    %v243 = vld [vmem:[%s1 + $0x6e0] sm:$0xff]
    %v244 = vld [vmem:[%s1 + $0x6e8] sm:$0xff]
    %v245 = vld [vmem:[%s1 + $0x6f0] sm:$0xff]
    %v246 = vld [vmem:[%s1 + $0x6f8] sm:$0xff]
    %v247 = vld [vmem:[%s1 + $0x700] sm:$0xff]
    %v248 = vld [vmem:[%s1 + $0x708] sm:$0xff]
    %v249 = vld [vmem:[%s1 + $0x710] sm:$0xff]
    %v250 = vld [vmem:[%s1 + $0x718] sm:$0xff]
    %v251 = vld [vmem:[%s1 + $0x720] sm:$0xff]
    %v252 = vld [vmem:[%s1 + $0x728] sm:$0xff]
    %v253 = vld [vmem:[%s1 + $0x730] sm:$0xff]
    %v254 = vld [vmem:[%s1 + $0x738] sm:$0xff]
    %v255 = vld [vmem:[%s1 + $0x740] sm:$0xff]
    %v256 = vld [vmem:[%s1 + $0x748] sm:$0xff]
    %v257 = vld [vmem:[%s1 + $0x750] sm:$0xff]
    %v258 = vld [vmem:[%s1 + $0x758] sm:$0xff]
    %v259 = vld [vmem:[%s1 + $0x760] sm:$0xff]
    %v260 = vld [vmem:[%s1 + $0x768] sm:$0xff]
    %v261 = vld [vmem:[%s1 + $0x770] sm:$0xff]
    %v262 = vld [vmem:[%s1 + $0x778] sm:$0xff]
    %v263 = vld [vmem:[%s1 + $0x780] sm:$0xff]
    %v264 = vld [vmem:[%s1 + $0x788] sm:$0xff]
    %v265 = vld [vmem:[%s1 + $0x790] sm:$0xff]
    %v266 = vld [vmem:[%s1 + $0x798] sm:$0xff]
    %v267 = vld [vmem:[%s1 + $0x7a0] sm:$0xff]
    %v268 = vld [vmem:[%s1 + $0x7a8] sm:$0xff]
    %v269 = vld [vmem:[%s1 + $0x7b0] sm:$0xff]
    %v270 = vld [vmem:[%s1 + $0x7b8] sm:$0xff]
    %v271 = vld [vmem:[%s1 + $0x7c0] sm:$0xff]
    %v272 = vld [vmem:[%s1 + $0x7c8] sm:$0xff]
    %v273 = vld [vmem:[%s1 + $0x7d0] sm:$0xff]
    %v274 = vld [vmem:[%s1 + $0x7d8] sm:$0xff]
    %v275 = vld [vmem:[%s1 + $0x7e0] sm:$0xff]
    %v276 = vld [vmem:[%s1 + $0x7e8] sm:$0xff]
    %v277 = vld [vmem:[%s1 + $0x7f0] sm:$0xff]
    %v278 = vld [vmem:[%s1 + $0x7f8] sm:$0xff]
    %v279 = vld [vmem:[%s2] sm:$0x1]
    %v281 = vlaneseq
    %v282 = vshrl.u32 %v281, 7
    %v283 = vsub.s32 0, %v282
    %v284 = vrot.slane %v279, %v283
    %v294 = vcombine.high %v15, %v15
    %v295 = vcombine.high %v16, %v16
    %v296 = vcombine.high %v17, %v17
    %v297 = vcombine.high %v18, %v18
    %v298 = vcombine.high %v19, %v19
    %v299 = vcombine.high %v20, %v20
    %v300 = vcombine.high %v21, %v21
    %v301 = vcombine.high %v22, %v22
    %310 = vmatprep.subr.mxu0 0.0
    %311 = vmatpush1.msra.mxu0 %v23
    %312 = vmatprep.subr.mxu0 0.0
    %313 = vmatpush1.msra.mxu0 %v24
    %314 = vmatprep.subr.mxu0 0.0
    %315 = vmatpush1.msra.mxu0 %v25
    %316 = vmatprep.subr.mxu0 0.0
    %317 = vmatpush1.msra.mxu0 %v26
    %318 = vmatprep.subr.mxu0 0.0
    %319 = vmatpush1.msra.mxu0 %v27
    %320 = vmatprep.subr.mxu0 0.0
    %321 = vmatpush1.msra.mxu0 %v28
    %322 = vmatprep.subr.mxu0 0.0
    %323 = vmatpush1.msra.mxu0 %v29
    %324 = vmatprep.subr.mxu0 0.0
    %325 = vmatpush1.msra.mxu0 %v30
    %326 = vmatprep.subr.mxu0 0.0
    %327 = vmatpush1.msra.mxu0 %v31
    %328 = vmatprep.subr.mxu0 0.0
    %329 = vmatpush1.msra.mxu0 %v32
    %330 = vmatprep.subr.mxu0 0.0
    %331 = vmatpush1.msra.mxu0 %v33
    %332 = vmatprep.subr.mxu0 0.0
    %333 = vmatpush1.msra.mxu0 %v34
    %334 = vmatprep.subr.mxu0 0.0
    %335 = vmatpush1.msra.mxu0 %v35
    %336 = vmatprep.subr.mxu0 0.0
    %337 = vmatpush1.msra.mxu0 %v36
    %338 = vmatprep.subr.mxu0 0.0
    %339 = vmatpush1.msra.mxu0 %v37
    %340 = vmatprep.subr.mxu0 0.0
    %341 = vmatpush1.msra.mxu0 %v38
    %342 = vmatprep.subr.mxu0 0.0
    %343 = vmatpush1.msra.mxu0 %v39
    %344 = vmatprep.subr.mxu0 0.0
    %345 = vmatpush1.msra.mxu0 %v40
    %346 = vmatprep.subr.mxu0 0.0
    %347 = vmatpush1.msra.mxu0 %v41
    %348 = vmatprep.subr.mxu0 0.0
    %349 = vmatpush1.msra.mxu0 %v42
    %350 = vmatprep.subr.mxu0 0.0
    %351 = vmatpush1.msra.mxu0 %v43
    %352 = vmatprep.subr.mxu0 0.0
    %353 = vmatpush1.msra.mxu0 %v44
    %354 = vmatprep.subr.mxu0 0.0
    %355 = vmatpush1.msra.mxu0 %v45
    %356 = vmatprep.subr.mxu0 0.0
    %357 = vmatpush1.msra.mxu0 %v46
    %358 = vmatprep.subr.mxu0 0.0
    %359 = vmatpush1.msra.mxu0 %v47
    %360 = vmatprep.subr.mxu0 0.0
    %361 = vmatpush1.msra.mxu0 %v48
    %362 = vmatprep.subr.mxu0 0.0
    %363 = vmatpush1.msra.mxu0 %v49
    %364 = vmatprep.subr.mxu0 0.0
    %365 = vmatpush1.msra.mxu0 %v50
    %366 = vmatprep.subr.mxu0 0.0
    %367 = vmatpush1.msra.mxu0 %v51
    %368 = vmatprep.subr.mxu0 0.0
    %369 = vmatpush1.msra.mxu0 %v52
    %370 = vmatprep.subr.mxu0 0.0
    %371 = vmatpush1.msra.mxu0 %v53
    %372 = vmatprep.subr.mxu0 0.0
    %373 = vmatpush1.msra.mxu0 %v54
    %374 = vmatprep.mubr.f32.mxu0 %v294
    %375 = vmatmul.mubr.f32.gmra.mrb[0].mxu0 %v15
    %v376 = vpop.f32.mrb[0].mxu0
    %v377 = vadd.f32 %v284, %v376
    %v378 = vpop.f32.mrb[0].mxu0
    %379 = vdwg.mxu0
    %380 = vmatprep.subr.mxu0 0.0
    %381 = vmatpush1.msra.mxu0 %v55
    %382 = vmatprep.subr.mxu0 0.0
    %383 = vmatpush1.msra.mxu0 %v56
    %384 = vmatprep.subr.mxu0 0.0
    %385 = vmatpush1.msra.mxu0 %v57
    %386 = vmatprep.subr.mxu0 0.0
    %387 = vmatpush1.msra.mxu0 %v58
    %388 = vmatprep.subr.mxu0 0.0
    %389 = vmatpush1.msra.mxu0 %v59
    %390 = vmatprep.subr.mxu0 0.0
    %391 = vmatpush1.msra.mxu0 %v60
    %392 = vmatprep.subr.mxu0 0.0
    %393 = vmatpush1.msra.mxu0 %v61
    %394 = vmatprep.subr.mxu0 0.0
    %395 = vmatpush1.msra.mxu0 %v62
    %396 = vmatprep.subr.mxu0 0.0
    %397 = vmatpush1.msra.mxu0 %v63
    %398 = vmatprep.subr.mxu0 0.0
    %399 = vmatpush1.msra.mxu0 %v64
    %400 = vmatprep.subr.mxu0 0.0
    %401 = vmatpush1.msra.mxu0 %v65
    %402 = vmatprep.subr.mxu0 0.0
    %403 = vmatpush1.msra.mxu0 %v66
    %404 = vmatprep.subr.mxu0 0.0
    %405 = vmatpush1.msra.mxu0 %v67
    %406 = vmatprep.subr.mxu0 0.0
    %407 = vmatpush1.msra.mxu0 %v68
    %408 = vmatprep.subr.mxu0 0.0
    %409 = vmatpush1.msra.mxu0 %v69
    %410 = vmatprep.subr.mxu0 0.0
    %411 = vmatpush1.msra.mxu0 %v70
    %412 = vmatprep.subr.mxu0 0.0
    %413 = vmatpush1.msra.mxu0 %v71
    %414 = vmatprep.subr.mxu0 0.0
    %415 = vmatpush1.msra.mxu0 %v72
    %416 = vmatprep.subr.mxu0 0.0
    %417 = vmatpush1.msra.mxu0 %v73
    %418 = vmatprep.subr.mxu0 0.0
    %419 = vmatpush1.msra.mxu0 %v74
    %420 = vmatprep.subr.mxu0 0.0
    %421 = vmatpush1.msra.mxu0 %v75
    %422 = vmatprep.subr.mxu0 0.0
    %423 = vmatpush1.msra.mxu0 %v76
    %424 = vmatprep.subr.mxu0 0.0
    %425 = vmatpush1.msra.mxu0 %v77
    %426 = vmatprep.subr.mxu0 0.0
    %427 = vmatpush1.msra.mxu0 %v78
    %428 = vmatprep.subr.mxu0 0.0
    %429 = vmatpush1.msra.mxu0 %v79
    %430 = vmatprep.subr.mxu0 0.0
    %431 = vmatpush1.msra.mxu0 %v80
    %432 = vmatprep.subr.mxu0 0.0
    %433 = vmatpush1.msra.mxu0 %v81
    %434 = vmatprep.subr.mxu0 0.0
    %435 = vmatpush1.msra.mxu0 %v82
    %436 = vmatprep.subr.mxu0 0.0
    %437 = vmatpush1.msra.mxu0 %v83
    %438 = vmatprep.subr.mxu0 0.0
    %439 = vmatpush1.msra.mxu0 %v84
    %440 = vmatprep.subr.mxu0 0.0
    %441 = vmatpush1.msra.mxu0 %v85
    %442 = vmatprep.subr.mxu0 0.0
    %443 = vmatpush1.msra.mxu0 %v86
    %444 = vmatprep.mubr.f32.mxu0 %v295
    %445 = vmatmul.mubr.f32.gmra.mrb[0].mxu0 %v16
    %v446 = vpop.f32.mrb[0].mxu0
    %v447 = vadd.f32 %v377, %v446
    %v448 = vpop.f32.mrb[0].mxu0
    %449 = vdwg.mxu0
    %450 = vmatprep.subr.mxu0 0.0
    %451 = vmatpush1.msra.mxu0 %v87
    %452 = vmatprep.subr.mxu0 0.0
    %453 = vmatpush1.msra.mxu0 %v88
    %454 = vmatprep.subr.mxu0 0.0
    %455 = vmatpush1.msra.mxu0 %v89
    %456 = vmatprep.subr.mxu0 0.0
    %457 = vmatpush1.msra.mxu0 %v90
    %458 = vmatprep.subr.mxu0 0.0
    %459 = vmatpush1.msra.mxu0 %v91
    %460 = vmatprep.subr.mxu0 0.0
    %461 = vmatpush1.msra.mxu0 %v92
    %462 = vmatprep.subr.mxu0 0.0
    %463 = vmatpush1.msra.mxu0 %v93
    %464 = vmatprep.subr.mxu0 0.0
    %465 = vmatpush1.msra.mxu0 %v94
    %466 = vmatprep.subr.mxu0 0.0
    %467 = vmatpush1.msra.mxu0 %v95
    %468 = vmatprep.subr.mxu0 0.0
    %469 = vmatpush1.msra.mxu0 %v96
    %470 = vmatprep.subr.mxu0 0.0
    %471 = vmatpush1.msra.mxu0 %v97
    %472 = vmatprep.subr.mxu0 0.0
    %473 = vmatpush1.msra.mxu0 %v98
    %474 = vmatprep.subr.mxu0 0.0
    %475 = vmatpush1.msra.mxu0 %v99
    %476 = vmatprep.subr.mxu0 0.0
    %477 = vmatpush1.msra.mxu0 %v100
    %478 = vmatprep.subr.mxu0 0.0
    %479 = vmatpush1.msra.mxu0 %v101
    %480 = vmatprep.subr.mxu0 0.0
    %481 = vmatpush1.msra.mxu0 %v102
    %482 = vmatprep.subr.mxu0 0.0
    %483 = vmatpush1.msra.mxu0 %v103
    %484 = vmatprep.subr.mxu0 0.0
    %485 = vmatpush1.msra.mxu0 %v104
    %486 = vmatprep.subr.mxu0 0.0
    %487 = vmatpush1.msra.mxu0 %v105
    %488 = vmatprep.subr.mxu0 0.0
    %489 = vmatpush1.msra.mxu0 %v106
    %490 = vmatprep.subr.mxu0 0.0
    %491 = vmatpush1.msra.mxu0 %v107
    %492 = vmatprep.subr.mxu0 0.0
    %493 = vmatpush1.msra.mxu0 %v108
    %494 = vmatprep.subr.mxu0 0.0
    %495 = vmatpush1.msra.mxu0 %v109
    %496 = vmatprep.subr.mxu0 0.0
    %497 = vmatpush1.msra.mxu0 %v110
    %498 = vmatprep.subr.mxu0 0.0
    %499 = vmatpush1.msra.mxu0 %v111
    %500 = vmatprep.subr.mxu0 0.0
    %501 = vmatpush1.msra.mxu0 %v112
    %502 = vmatprep.subr.mxu0 0.0
    %503 = vmatpush1.msra.mxu0 %v113
    %504 = vmatprep.subr.mxu0 0.0
    %505 = vmatpush1.msra.mxu0 %v114
    %506 = vmatprep.subr.mxu0 0.0
    %507 = vmatpush1.msra.mxu0 %v115
    %508 = vmatprep.subr.mxu0 0.0
    %509 = vmatpush1.msra.mxu0 %v116
    %510 = vmatprep.subr.mxu0 0.0
    %511 = vmatpush1.msra.mxu0 %v117
    %512 = vmatprep.subr.mxu0 0.0
    %513 = vmatpush1.msra.mxu0 %v118
    %514 = vmatprep.mubr.f32.mxu0 %v296
    %515 = vmatmul.mubr.f32.gmra.mrb[0].mxu0 %v17
    %v516 = vpop.f32.mrb[0].mxu0
    %v517 = vadd.f32 %v447, %v516
    %v518 = vpop.f32.mrb[0].mxu0
    %519 = vdwg.mxu0
    %520 = vmatprep.subr.mxu0 0.0
    %521 = vmatpush1.msra.mxu0 %v119
    %522 = vmatprep.subr.mxu0 0.0
    %523 = vmatpush1.msra.mxu0 %v120
    %524 = vmatprep.subr.mxu0 0.0
    %525 = vmatpush1.msra.mxu0 %v121
    %526 = vmatprep.subr.mxu0 0.0
    %527 = vmatpush1.msra.mxu0 %v122
    %528 = vmatprep.subr.mxu0 0.0
    %529 = vmatpush1.msra.mxu0 %v123
    %530 = vmatprep.subr.mxu0 0.0
    %531 = vmatpush1.msra.mxu0 %v124
    %532 = vmatprep.subr.mxu0 0.0
    %533 = vmatpush1.msra.mxu0 %v125
    %534 = vmatprep.subr.mxu0 0.0
    %535 = vmatpush1.msra.mxu0 %v126
    %536 = vmatprep.subr.mxu0 0.0
    %537 = vmatpush1.msra.mxu0 %v127
    %538 = vmatprep.subr.mxu0 0.0
    %539 = vmatpush1.msra.mxu0 %v128
    %540 = vmatprep.subr.mxu0 0.0
    %541 = vmatpush1.msra.mxu0 %v129
    %542 = vmatprep.subr.mxu0 0.0
    %543 = vmatpush1.msra.mxu0 %v130
    %544 = vmatprep.subr.mxu0 0.0
    %545 = vmatpush1.msra.mxu0 %v131
    %546 = vmatprep.subr.mxu0 0.0
    %547 = vmatpush1.msra.mxu0 %v132
    %548 = vmatprep.subr.mxu0 0.0
    %549 = vmatpush1.msra.mxu0 %v133
    %550 = vmatprep.subr.mxu0 0.0
    %551 = vmatpush1.msra.mxu0 %v134
    %552 = vmatprep.subr.mxu0 0.0
    %553 = vmatpush1.msra.mxu0 %v135
    %554 = vmatprep.subr.mxu0 0.0
    %555 = vmatpush1.msra.mxu0 %v136
    %556 = vmatprep.subr.mxu0 0.0
    %557 = vmatpush1.msra.mxu0 %v137
    %558 = vmatprep.subr.mxu0 0.0
    %559 = vmatpush1.msra.mxu0 %v138
    %560 = vmatprep.subr.mxu0 0.0
    %561 = vmatpush1.msra.mxu0 %v139
    %562 = vmatprep.subr.mxu0 0.0
    %563 = vmatpush1.msra.mxu0 %v140
    %564 = vmatprep.subr.mxu0 0.0
    %565 = vmatpush1.msra.mxu0 %v141
    %566 = vmatprep.subr.mxu0 0.0
    %567 = vmatpush1.msra.mxu0 %v142
    %568 = vmatprep.subr.mxu0 0.0
    %569 = vmatpush1.msra.mxu0 %v143
    %570 = vmatprep.subr.mxu0 0.0
    %571 = vmatpush1.msra.mxu0 %v144
    %572 = vmatprep.subr.mxu0 0.0
    %573 = vmatpush1.msra.mxu0 %v145
    %574 = vmatprep.subr.mxu0 0.0
    %575 = vmatpush1.msra.mxu0 %v146
    %576 = vmatprep.subr.mxu0 0.0
    %577 = vmatpush1.msra.mxu0 %v147
    %578 = vmatprep.subr.mxu0 0.0
    %579 = vmatpush1.msra.mxu0 %v148
    %580 = vmatprep.subr.mxu0 0.0
    %581 = vmatpush1.msra.mxu0 %v149
    %582 = vmatprep.subr.mxu0 0.0
    %583 = vmatpush1.msra.mxu0 %v150
    %584 = vmatprep.mubr.f32.mxu0 %v297
    %585 = vmatmul.mubr.f32.gmra.mrb[0].mxu0 %v18
    %v586 = vpop.f32.mrb[0].mxu0
    %v587 = vadd.f32 %v517, %v586
    %v588 = vpop.f32.mrb[0].mxu0
    %589 = vdwg.mxu0
    %590 = vmatprep.subr.mxu0 0.0
    %591 = vmatpush1.msra.mxu0 %v151
    %592 = vmatprep.subr.mxu0 0.0
    %593 = vmatpush1.msra.mxu0 %v152
    %594 = vmatprep.subr.mxu0 0.0
    %595 = vmatpush1.msra.mxu0 %v153
    %596 = vmatprep.subr.mxu0 0.0
    %597 = vmatpush1.msra.mxu0 %v154
    %598 = vmatprep.subr.mxu0 0.0
    %599 = vmatpush1.msra.mxu0 %v155
    %600 = vmatprep.subr.mxu0 0.0
    %601 = vmatpush1.msra.mxu0 %v156
    %602 = vmatprep.subr.mxu0 0.0
    %603 = vmatpush1.msra.mxu0 %v157
    %604 = vmatprep.subr.mxu0 0.0
    %605 = vmatpush1.msra.mxu0 %v158
    %606 = vmatprep.subr.mxu0 0.0
    %607 = vmatpush1.msra.mxu0 %v159
    %608 = vmatprep.subr.mxu0 0.0
    %609 = vmatpush1.msra.mxu0 %v160
    %610 = vmatprep.subr.mxu0 0.0
    %611 = vmatpush1.msra.mxu0 %v161
    %612 = vmatprep.subr.mxu0 0.0
    %613 = vmatpush1.msra.mxu0 %v162
    %614 = vmatprep.subr.mxu0 0.0
    %615 = vmatpush1.msra.mxu0 %v163
    %616 = vmatprep.subr.mxu0 0.0
    %617 = vmatpush1.msra.mxu0 %v164
    %618 = vmatprep.subr.mxu0 0.0
    %619 = vmatpush1.msra.mxu0 %v165
    %620 = vmatprep.subr.mxu0 0.0
    %621 = vmatpush1.msra.mxu0 %v166
    %622 = vmatprep.subr.mxu0 0.0
    %623 = vmatpush1.msra.mxu0 %v167
    %624 = vmatprep.subr.mxu0 0.0
    %625 = vmatpush1.msra.mxu0 %v168
    %626 = vmatprep.subr.mxu0 0.0
    %627 = vmatpush1.msra.mxu0 %v169
    %628 = vmatprep.subr.mxu0 0.0
    %629 = vmatpush1.msra.mxu0 %v170
    %630 = vmatprep.subr.mxu0 0.0
    %631 = vmatpush1.msra.mxu0 %v171
    %632 = vmatprep.subr.mxu0 0.0
    %633 = vmatpush1.msra.mxu0 %v172
    %634 = vmatprep.subr.mxu0 0.0
    %635 = vmatpush1.msra.mxu0 %v173
    %636 = vmatprep.subr.mxu0 0.0
    %637 = vmatpush1.msra.mxu0 %v174
    %638 = vmatprep.subr.mxu0 0.0
    %639 = vmatpush1.msra.mxu0 %v175
    %640 = vmatprep.subr.mxu0 0.0
    %641 = vmatpush1.msra.mxu0 %v176
    %642 = vmatprep.subr.mxu0 0.0
    %643 = vmatpush1.msra.mxu0 %v177
    %644 = vmatprep.subr.mxu0 0.0
    %645 = vmatpush1.msra.mxu0 %v178
    %646 = vmatprep.subr.mxu0 0.0
    %647 = vmatpush1.msra.mxu0 %v179
    %648 = vmatprep.subr.mxu0 0.0
    %649 = vmatpush1.msra.mxu0 %v180
    %650 = vmatprep.subr.mxu0 0.0
    %651 = vmatpush1.msra.mxu0 %v181
    %652 = vmatprep.subr.mxu0 0.0
    %653 = vmatpush1.msra.mxu0 %v182
    %654 = vmatprep.mubr.f32.mxu0 %v298
    %655 = vmatmul.mubr.f32.gmra.mrb[0].mxu0 %v19
    %v656 = vpop.f32.mrb[0].mxu0
    %v657 = vadd.f32 %v587, %v656
    %v658 = vpop.f32.mrb[0].mxu0
    %659 = vdwg.mxu0
    %660 = vmatprep.subr.mxu0 0.0
    %661 = vmatpush1.msra.mxu0 %v183
    %662 = vmatprep.subr.mxu0 0.0
    %663 = vmatpush1.msra.mxu0 %v184
    %664 = vmatprep.subr.mxu0 0.0
    %665 = vmatpush1.msra.mxu0 %v185
    %666 = vmatprep.subr.mxu0 0.0
    %667 = vmatpush1.msra.mxu0 %v186
    %668 = vmatprep.subr.mxu0 0.0
    %669 = vmatpush1.msra.mxu0 %v187
    %670 = vmatprep.subr.mxu0 0.0
    %671 = vmatpush1.msra.mxu0 %v188
    %672 = vmatprep.subr.mxu0 0.0
    %673 = vmatpush1.msra.mxu0 %v189
    %674 = vmatprep.subr.mxu0 0.0
    %675 = vmatpush1.msra.mxu0 %v190
    %676 = vmatprep.subr.mxu0 0.0
    %677 = vmatpush1.msra.mxu0 %v191
    %678 = vmatprep.subr.mxu0 0.0
    %679 = vmatpush1.msra.mxu0 %v192
    %680 = vmatprep.subr.mxu0 0.0
    %681 = vmatpush1.msra.mxu0 %v193
    %682 = vmatprep.subr.mxu0 0.0
    %683 = vmatpush1.msra.mxu0 %v194
    %684 = vmatprep.subr.mxu0 0.0
    %685 = vmatpush1.msra.mxu0 %v195
    %686 = vmatprep.subr.mxu0 0.0
    %687 = vmatpush1.msra.mxu0 %v196
    %688 = vmatprep.subr.mxu0 0.0
    %689 = vmatpush1.msra.mxu0 %v197
    %690 = vmatprep.subr.mxu0 0.0
    %691 = vmatpush1.msra.mxu0 %v198
    %692 = vmatprep.subr.mxu0 0.0
    %693 = vmatpush1.msra.mxu0 %v199
    %694 = vmatprep.subr.mxu0 0.0
    %695 = vmatpush1.msra.mxu0 %v200
    %696 = vmatprep.subr.mxu0 0.0
    %697 = vmatpush1.msra.mxu0 %v201
    %698 = vmatprep.subr.mxu0 0.0
    %699 = vmatpush1.msra.mxu0 %v202
    %700 = vmatprep.subr.mxu0 0.0
    %701 = vmatpush1.msra.mxu0 %v203
    %702 = vmatprep.subr.mxu0 0.0
    %703 = vmatpush1.msra.mxu0 %v204
    %704 = vmatprep.subr.mxu0 0.0
    %705 = vmatpush1.msra.mxu0 %v205
    %706 = vmatprep.subr.mxu0 0.0
    %707 = vmatpush1.msra.mxu0 %v206
    %708 = vmatprep.subr.mxu0 0.0
    %709 = vmatpush1.msra.mxu0 %v207
    %710 = vmatprep.subr.mxu0 0.0
    %711 = vmatpush1.msra.mxu0 %v208
    %712 = vmatprep.subr.mxu0 0.0
    %713 = vmatpush1.msra.mxu0 %v209
    %714 = vmatprep.subr.mxu0 0.0
    %715 = vmatpush1.msra.mxu0 %v210
    %716 = vmatprep.subr.mxu0 0.0
    %717 = vmatpush1.msra.mxu0 %v211
    %718 = vmatprep.subr.mxu0 0.0
    %719 = vmatpush1.msra.mxu0 %v212
    %720 = vmatprep.subr.mxu0 0.0
    %721 = vmatpush1.msra.mxu0 %v213
    %722 = vmatprep.subr.mxu0 0.0
    %723 = vmatpush1.msra.mxu0 %v214
    %724 = vmatprep.mubr.f32.mxu0 %v299
    %725 = vmatmul.mubr.f32.gmra.mrb[0].mxu0 %v20
    %v726 = vpop.f32.mrb[0].mxu0
    %v727 = vadd.f32 %v657, %v726
    %v728 = vpop.f32.mrb[0].mxu0
    %729 = vdwg.mxu0
    %730 = vmatprep.subr.mxu0 0.0
    %731 = vmatpush1.msra.mxu0 %v215
    %732 = vmatprep.subr.mxu0 0.0
    %733 = vmatpush1.msra.mxu0 %v216
    %734 = vmatprep.subr.mxu0 0.0
    %735 = vmatpush1.msra.mxu0 %v217
    %736 = vmatprep.subr.mxu0 0.0
    %737 = vmatpush1.msra.mxu0 %v218
    %738 = vmatprep.subr.mxu0 0.0
    %739 = vmatpush1.msra.mxu0 %v219
    %740 = vmatprep.subr.mxu0 0.0
    %741 = vmatpush1.msra.mxu0 %v220
    %742 = vmatprep.subr.mxu0 0.0
    %743 = vmatpush1.msra.mxu0 %v221
    %744 = vmatprep.subr.mxu0 0.0
    %745 = vmatpush1.msra.mxu0 %v222
    %746 = vmatprep.subr.mxu0 0.0
    %747 = vmatpush1.msra.mxu0 %v223
    %748 = vmatprep.subr.mxu0 0.0
    %749 = vmatpush1.msra.mxu0 %v224
    %750 = vmatprep.subr.mxu0 0.0
    %751 = vmatpush1.msra.mxu0 %v225
    %752 = vmatprep.subr.mxu0 0.0
    %753 = vmatpush1.msra.mxu0 %v226
    %754 = vmatprep.subr.mxu0 0.0
    %755 = vmatpush1.msra.mxu0 %v227
    %756 = vmatprep.subr.mxu0 0.0
    %757 = vmatpush1.msra.mxu0 %v228
    %758 = vmatprep.subr.mxu0 0.0
    %759 = vmatpush1.msra.mxu0 %v229
    %760 = vmatprep.subr.mxu0 0.0
    %761 = vmatpush1.msra.mxu0 %v230
    %762 = vmatprep.subr.mxu0 0.0
    %763 = vmatpush1.msra.mxu0 %v231
    %764 = vmatprep.subr.mxu0 0.0
    %765 = vmatpush1.msra.mxu0 %v232
    %766 = vmatprep.subr.mxu0 0.0
    %767 = vmatpush1.msra.mxu0 %v233
    %768 = vmatprep.subr.mxu0 0.0
    %769 = vmatpush1.msra.mxu0 %v234
    %770 = vmatprep.subr.mxu0 0.0
    %771 = vmatpush1.msra.mxu0 %v235
    %772 = vmatprep.subr.mxu0 0.0
    %773 = vmatpush1.msra.mxu0 %v236
    %774 = vmatprep.subr.mxu0 0.0
    %775 = vmatpush1.msra.mxu0 %v237
    %776 = vmatprep.subr.mxu0 0.0
    %777 = vmatpush1.msra.mxu0 %v238
    %778 = vmatprep.subr.mxu0 0.0
    %779 = vmatpush1.msra.mxu0 %v239
    %780 = vmatprep.subr.mxu0 0.0
    %781 = vmatpush1.msra.mxu0 %v240
    %782 = vmatprep.subr.mxu0 0.0
    %783 = vmatpush1.msra.mxu0 %v241
    %784 = vmatprep.subr.mxu0 0.0
    %785 = vmatpush1.msra.mxu0 %v242
    %786 = vmatprep.subr.mxu0 0.0
    %787 = vmatpush1.msra.mxu0 %v243
    %788 = vmatprep.subr.mxu0 0.0
    %789 = vmatpush1.msra.mxu0 %v244
    %790 = vmatprep.subr.mxu0 0.0
    %791 = vmatpush1.msra.mxu0 %v245
    %792 = vmatprep.subr.mxu0 0.0
    %793 = vmatpush1.msra.mxu0 %v246
    %794 = vmatprep.mubr.f32.mxu0 %v300
    %795 = vmatmul.mubr.f32.gmra.mrb[0].mxu0 %v21
    %v796 = vpop.f32.mrb[0].mxu0
    %v797 = vadd.f32 %v727, %v796
    %v798 = vpop.f32.mrb[0].mxu0
    %799 = vdwg.mxu0
    %800 = vmatprep.subr.mxu0 0.0
    %801 = vmatpush1.msra.mxu0 %v247
    %802 = vmatprep.subr.mxu0 0.0
    %803 = vmatpush1.msra.mxu0 %v248
    %804 = vmatprep.subr.mxu0 0.0
    %805 = vmatpush1.msra.mxu0 %v249
    %806 = vmatprep.subr.mxu0 0.0
    %807 = vmatpush1.msra.mxu0 %v250
    %808 = vmatprep.subr.mxu0 0.0
    %809 = vmatpush1.msra.mxu0 %v251
    %810 = vmatprep.subr.mxu0 0.0
    %811 = vmatpush1.msra.mxu0 %v252
    %812 = vmatprep.subr.mxu0 0.0
    %813 = vmatpush1.msra.mxu0 %v253
    %814 = vmatprep.subr.mxu0 0.0
    %815 = vmatpush1.msra.mxu0 %v254
    %816 = vmatprep.subr.mxu0 0.0
    %817 = vmatpush1.msra.mxu0 %v255
    %818 = vmatprep.subr.mxu0 0.0
    %819 = vmatpush1.msra.mxu0 %v256
    %820 = vmatprep.subr.mxu0 0.0
    %821 = vmatpush1.msra.mxu0 %v257
    %822 = vmatprep.subr.mxu0 0.0
    %823 = vmatpush1.msra.mxu0 %v258
    %824 = vmatprep.subr.mxu0 0.0
    %825 = vmatpush1.msra.mxu0 %v259
    %826 = vmatprep.subr.mxu0 0.0
    %827 = vmatpush1.msra.mxu0 %v260
    %828 = vmatprep.subr.mxu0 0.0
    %829 = vmatpush1.msra.mxu0 %v261
    %830 = vmatprep.subr.mxu0 0.0
    %831 = vmatpush1.msra.mxu0 %v262
    %832 = vmatprep.subr.mxu0 0.0
    %833 = vmatpush1.msra.mxu0 %v263
    %834 = vmatprep.subr.mxu0 0.0
    %835 = vmatpush1.msra.mxu0 %v264
    %836 = vmatprep.subr.mxu0 0.0
    %837 = vmatpush1.msra.mxu0 %v265
    %838 = vmatprep.subr.mxu0 0.0
    %839 = vmatpush1.msra.mxu0 %v266
    %840 = vmatprep.subr.mxu0 0.0
    %841 = vmatpush1.msra.mxu0 %v267
    %842 = vmatprep.subr.mxu0 0.0
    %843 = vmatpush1.msra.mxu0 %v268
    %844 = vmatprep.subr.mxu0 0.0
    %845 = vmatpush1.msra.mxu0 %v269
    %846 = vmatprep.subr.mxu0 0.0
    %847 = vmatpush1.msra.mxu0 %v270
    %848 = vmatprep.subr.mxu0 0.0
    %849 = vmatpush1.msra.mxu0 %v271
    %850 = vmatprep.subr.mxu0 0.0
    %851 = vmatpush1.msra.mxu0 %v272
    %852 = vmatprep.subr.mxu0 0.0
    %853 = vmatpush1.msra.mxu0 %v273
    %854 = vmatprep.subr.mxu0 0.0
    %855 = vmatpush1.msra.mxu0 %v274
    %856 = vmatprep.subr.mxu0 0.0
    %857 = vmatpush1.msra.mxu0 %v275
    %858 = vmatprep.subr.mxu0 0.0
    %859 = vmatpush1.msra.mxu0 %v276
    %860 = vmatprep.subr.mxu0 0.0
    %861 = vmatpush1.msra.mxu0 %v277
    %862 = vmatprep.subr.mxu0 0.0
    %863 = vmatpush1.msra.mxu0 %v278
    %864 = vmatprep.mubr.f32.mxu0 %v301
    %865 = vmatmul.mubr.f32.gmra.mrb[0].mxu0 %v22
    %v866 = vpop.f32.mrb[0].mxu0
    %v867 = vadd.f32 %v797, %v866
    %v868 = vpop.f32.mrb[0].mxu0
    %869 = vdwg.mxu0
    %vm870 = vcmask 125952
    %871 = vst.msk [vmem:[#allocation2] sm:$0xf] %vm870, %v867
    // Predicated region
    $region14: #{classification_head_forward.1} parent=1 // pred_check
      _
    $region15: #{classification_head_forward.1} parent=1 // pred_check_branch
      %873 = sbr.rel (0) target = $region17
    $region16: #{classification_head_forward.1} parent=1 // pred_region
      %s875 = ssub.s32 64, 64
      %876 = vsyncadd [#allocation3], %s875
      %s878 = sshll.u32 [#allocation2], 4
      %s879 = int_to_ptr.vmem [resolvable:$true] %s878
      %881 = dma.vmem_to_hbm [thread:$0]  %s879, 64, %s3, [#allocation3]
    $region17: #{classification_head_forward.1} parent=1 // pred_fallthru
      _
    // Predicated region
    $region18: #{classification_head_forward.1} parent=1 // pred_check
      _
    $region19: #{classification_head_forward.1} parent=1 // pred_check_branch
      %883 = sbr.rel (0) target = $region21
    $region20: #{classification_head_forward.1} parent=1 // pred_region
      %884 = dma.done [#allocation3], 64
    $region21: #{classification_head_forward.1} parent=1 // pred_fallthru
      _
    %885 = vsyncpa [#allocation3], 1

</llo_original>
